<compile_context>
chip_gen: v6e
topology: v6e:2x2x1
jax: 0.10.0
libtpu: 0.0.40
codegen_flags: <defaults>
</compile_context>

<pallas_src>
import functools

import jax
import jax.numpy as jnp
from jax.experimental import pallas as pl
from jax.experimental.pallas import tpu as pltpu


_LANE = 128
_SUBLANE = 8
_NEG_LARGE = -1e30          # finite "effectively -inf" for padded bias lanes


def _round_up(a, m):
    return ((a + m - 1) // m) * m


# ---------------------------------------------------------------------------
# Pallas kernel: fused linear layer + categorical logit (log-prob) normalization
# ---------------------------------------------------------------------------
def _categorical_logits_kernel(x_ref, wt_ref, b_ref, logits_ref):
    # In-kernel bf16 cast (VPU) directly before the MXU dot.
    x = x_ref[...].astype(jnp.bfloat16)      # (TB, D)
    wt = wt_ref[...]                         # (D, Npad) bf16, VMEM-resident
    b = b_ref[...]                           # (1, Npad) f32, VMEM-resident

    # Linear: x @ W^T + b  (bf16 MXU, f32 accumulate, f32 bias add).
    raw = jnp.dot(x, wt, preferred_element_type=jnp.float32) + b

    # logits <- raw - logsumexp(raw, -1); padded lanes hold -1e30 so their
    # exp underflows to exactly 0 and they do not perturb the result.
    m = jnp.max(raw, axis=-1, keepdims=True)
    e = jnp.exp(raw - m)
    s = jnp.sum(e, axis=-1, keepdims=True)
    logits_ref[...] = raw - (m + jnp.log(s))


# ---------------------------------------------------------------------------
# Tile / VMEM sizing helpers
# ---------------------------------------------------------------------------
def _vmem_bytes(tb, d, npad, x_itemsize):
    return (2 * tb * d * x_itemsize          # double-buffered x blocks
            + 2 * tb * npad * 4              # double-buffered f32 out blocks
            + 2 * d * npad * 2               # bf16 weight (conservative 2x)
            + 2 * npad * 4)                  # bias


def _choose_tb(batch, block_b):
    if batch <= _SUBLANE:
        return batch                         # full-extent block: always legal
    cap = _round_up(min(block_b, batch), _SUBLANE)        # multiple-of-8 tile
    half = _round_up(pl.cdiv(batch, 2), _SUBLANE)         # >= 2 grid steps
    return max(_SUBLANE, min(cap, half))


# ---------------------------------------------------------------------------
# Forward pass
# ---------------------------------------------------------------------------
@functools.partial(jax.jit, static_argnames=("num_outputs", "block_b"))
def categorical_forward_logits(x, weight_t_pad, bias_pad, num_outputs, *,
                               block_b=1024):
    """x: (B, D); weight_t_pad: (D, Npad) bf16; bias_pad: (1, Npad) f32.

    Returns normalized logits (log-probs), shape (B, num_outputs), f32.
    """
    B, D = x.shape
    Npad = weight_t_pad.shape[1]

    TB = _choose_tb(B, block_b)
    vmem_budget = 40 * 1024 * 1024           # headroom under v7x 64 MiB physical
    while _vmem_bytes(TB, D, Npad, x.dtype.itemsize) > vmem_budget and TB > _SUBLANE:
        TB = max(_SUBLANE, _round_up(TB // 2, _SUBLANE))
    grid_b = pl.cdiv(B, TB)

    need = _vmem_bytes(TB, D, Npad, x.dtype.itemsize)
    vmem_limit = int(min(max(2 * need, 32 * 1024 * 1024), 64 * 1024 * 1024))

    cost = pl.CostEstimate(
        flops=2 * B * D * Npad,
        transcendentals=B * (Npad + 1),                    # exp + log
        bytes_accessed=(x.dtype.itemsize * B * D           # x (native dtype)
                        + 2 * D * Npad                     # bf16 weight
                        + 4 * Npad                         # bias
                        + 4 * B * Npad),                   # f32 output
    )

    logits_pad = pl.pallas_call(
        _categorical_logits_kernel,
        out_shape=jax.ShapeDtypeStruct((B, Npad), jnp.float32),
        grid=(grid_b,),
        in_specs=[
            pl.BlockSpec((TB, D), lambda i: (i, 0)),       # batch-tiled x
            pl.BlockSpec((D, Npad), lambda i: (0, 0)),     # resident weight
            pl.BlockSpec((1, Npad), lambda i: (0, 0)),     # resident bias
        ],
        out_specs=pl.BlockSpec((TB, Npad), lambda i: (i, 0)),   # lane-dense
        compiler_params=pltpu.CompilerParams(
            dimension_semantics=("parallel",),             # megacore on v7x
            vmem_limit_bytes=vmem_limit,
        ),
        cost_estimate=cost,
    )(x, weight_t_pad, bias_pad)

    if Npad != num_outputs:
        logits_pad = logits_pad[:, :num_outputs]           # drop padded lanes
    return logits_pad


def categorical_forward(x, weight_t_pad, bias_pad, num_outputs, *, block_b=1024):
    return FixedCategorical(logits=categorical_forward_logits(
        x, weight_t_pad, bias_pad, num_outputs, block_b=block_b))


# ---------------------------------------------------------------------------
# JAX-side equivalent of FixedCategorical (thin wrapper over kernel output)
# ---------------------------------------------------------------------------
class FixedCategorical:
    def __init__(self, logits):
        self.logits = logits          # normalized logits == log-probs

    @property
    def probs(self):
        return jnp.exp(self.logits)   # softmax(raw logits), computed lazily

    def sample(self, key):
        # matches torch sample().unsqueeze(-1)
        return jax.random.categorical(key, self.logits, axis=-1)[..., None]

    def log_probs(self, actions):
        a = actions.reshape(actions.shape[0], -1)                 # squeeze(-1)
        lp = jnp.take_along_axis(self.logits, a, axis=-1)
        return lp.reshape(actions.shape[0], -1).sum(-1)[:, None]

    def mode(self):
        # argmax(probs) == argmax(logits)
        return jnp.argmax(self.logits, axis=-1, keepdims=True)


# ---------------------------------------------------------------------------
# Parameter init: orthogonal_ with gain=0.01, bias=0 (mirrors the PyTorch
# init_ lambda).  Weight is transposed + lane-padded + cast to bf16 ONCE.
# ---------------------------------------------------------------------------
def orthogonal_init(key, rows, cols, gain):
    transpose = rows < cols
    r, c = (cols, rows) if transpose else (rows, cols)
    a = jax.random.normal(key, (r, c), dtype=jnp.float32)
    q, rr = jnp.linalg.qr(a)
    q = q * jnp.sign(jnp.diagonal(rr))   # make decomposition unique
    if transpose:
        q = q.T
    return gain * q[:rows, :cols]


def pack_categorical_params(weight, bias):
    """weight: (N, D) f32; bias: (N,) f32 -> ((D, Npad) bf16, (1, Npad) f32)."""
    N, D = weight.shape
    npad = _round_up(N, _LANE)
    wt = jnp.zeros((D, npad), dtype=jnp.bfloat16)
    wt = wt.at[:, :N].set(weight.T.astype(jnp.bfloat16))
    bp = jnp.full((1, npad), _NEG_LARGE, dtype=jnp.float32)
    bp = bp.at[:, :N].set(bias.astype(jnp.float32))
    return wt, bp


def make_categorical_params(key, num_inputs, num_outputs):
    w = orthogonal_init(key, num_outputs, num_inputs, gain=0.01)   # (N, D)
    b = jnp.zeros((num_outputs,), dtype=jnp.float32)
    return pack_categorical_params(w, b)


# ---------------------------------------------------------------------------
if __name__ == "__main__":
    key = jax.random.PRNGKey(0)
    k_x, k_w, k_s = jax.random.split(key, 3)

    batch = 8
    num_inputs = 32
    num_outputs = 16

    x = jax.random.normal(k_x, (batch, num_inputs), dtype=jnp.float32)

    w = orthogonal_init(k_w, num_outputs, num_inputs, gain=0.01)   # (N, D) f32
    b = jnp.zeros((num_outputs,), dtype=jnp.float32)
    weight_t_pad, bias_pad = pack_categorical_params(w, b)

    dist = categorical_forward(x, weight_t_pad, bias_pad, num_outputs)
    jax.block_until_ready(dist.logits)

    # pure-JAX reference with the same bf16 rounding as the kernel's MXU path
    x_r = x.astype(jnp.bfloat16).astype(jnp.float32)
    w_r = w.astype(jnp.bfloat16).astype(jnp.float32)
    raw_ref = x_r @ w_r.T + b
    logits_ref = raw_ref - jax.scipy.special.logsumexp(raw_ref, axis=-1,
                                                       keepdims=True)
    probs_ref = jax.nn.softmax(raw_ref, axis=-1)

    assert dist.logits.shape == (batch, num_outputs)
    assert jnp.allclose(dist.logits, logits_ref, atol=1e-5, rtol=1e-5)
    assert jnp.allclose(dist.probs, probs_ref, atol=1e-5, rtol=1e-5)
    assert jnp.allclose(dist.probs.sum(-1), 1.0, atol=1e-4)

    # exercise distribution methods (plain-JAX glue outside the kernel)
    mode = dist.mode()
    lp = dist.log_probs(mode)
    samp = dist.sample(k_s)
    jax.block_until_ready((mode, lp, samp))
    assert samp.shape == (batch, 1) and mode.shape == (batch, 1)
    assert lp.shape == (batch, 1)

    print("KERNEL_OK")
</pallas_src>

<mosaic_0001>
module attributes {stable_mosaic.version = 11 : i64} {
  func.func @_categorical_logits_kernel(%arg0: i32, %arg1: memref<8x32xf32, #tpu.memory_space<vmem>>, %arg2: memref<32x128xbf16, #tpu.memory_space<vmem>>, %arg3: memref<1x128xf32, #tpu.memory_space<vmem>>, %arg4: memref<8x128xf32, #tpu.memory_space<vmem>>) attributes {dimension_semantics = [#tpu.dimension_semantics<parallel>], iteration_bounds = array<i64: 1>, scalar_prefetch = 0 : i64, scratch_operands = 0 : i64, tpu.core_type = #tpu.core_type<tc>, window_params = [{transform_indices = @transform_0, window_bounds = array<i64: 8, 32>}, {pipeline_mode = #tpu.pipeline_mode<synchronous>, transform_indices = @transform_1, window_bounds = array<i64: 32, 128>}, {pipeline_mode = #tpu.pipeline_mode<synchronous>, transform_indices = @transform_2, window_bounds = array<i64: 1, 128>}, {transform_indices = @transform_3, window_bounds = array<i64: 8, 128>}]} {
    %c0 = arith.constant 0 : index
    %c0_0 = arith.constant 0 : index
    %0 = vector.load %arg1[%c0, %c0_0] : memref<8x32xf32, #tpu.memory_space<vmem>>, vector<8x32xf32>
    %1 = arith.truncf %0 : vector<8x32xf32> to vector<8x32xbf16>
    %c0_1 = arith.constant 0 : index
    %c0_2 = arith.constant 0 : index
    %2 = vector.load %arg2[%c0_1, %c0_2] : memref<32x128xbf16, #tpu.memory_space<vmem>>, vector<32x128xbf16>
    %c0_3 = arith.constant 0 : index
    %c0_4 = arith.constant 0 : index
    %3 = vector.load %arg3[%c0_3, %c0_4] : memref<1x128xf32, #tpu.memory_space<vmem>>, vector<1x128xf32>
    %cst = arith.constant dense<0.000000e+00> : vector<8x128xf32>
    %4 = tpu.matmul %1, %2, %cst {dimension_numbers = #tpu.dot_dimension_numbers<[1], [0], [0], [1], [0, 0, 1, 1], [], []>} : vector<8x32xbf16>, vector<32x128xbf16>, vector<8x128xf32> -> vector<8x128xf32>
    %5 = vector.broadcast %3 : vector<1x128xf32> to vector<8x128xf32>
    %6 = arith.addf %4, %5 : vector<8x128xf32>
    %cst_5 = arith.constant dense<0xFF800000> : vector<8xf32>
    %7 = vector.multi_reduction <maximumf>, %6, %cst_5 [1] : vector<8x128xf32> to vector<8xf32>
    %8 = vector.shape_cast %7 : vector<8xf32> to vector<8x1xf32>
    %9 = vector.broadcast %8 : vector<8x1xf32> to vector<8x128xf32>
    %10 = arith.subf %6, %9 : vector<8x128xf32>
    %11 = math.exp %10 : vector<8x128xf32>
    %cst_6 = arith.constant dense<0.000000e+00> : vector<8xf32>
    %12 = vector.multi_reduction <add>, %11, %cst_6 [1] : vector<8x128xf32> to vector<8xf32>
    %13 = vector.shape_cast %12 : vector<8xf32> to vector<8x1xf32>
    %14 = math.log %13 : vector<8x1xf32>
    %15 = arith.addf %8, %14 : vector<8x1xf32>
    %16 = vector.broadcast %15 : vector<8x1xf32> to vector<8x128xf32>
    %17 = arith.subf %6, %16 : vector<8x128xf32>
    %c0_7 = arith.constant 0 : index
    %c0_8 = arith.constant 0 : index
    %18 = vector.load %arg4[%c0_7, %c0_8] : memref<8x128xf32, #tpu.memory_space<vmem>>, vector<8x128xf32>
    tpu.vector_store %arg4[%c0_7, %c0_8], %17 {strides = array<i32>} : memref<8x128xf32, #tpu.memory_space<vmem>>, vector<8x128xf32>,
    return
  }
  func.func @transform_0(%arg0: i32) -> (i32, i32) {
    %c0_i32 = arith.constant 0 : i32
    %c0_i32_0 = arith.constant 0 : i32
    return %arg0, %c0_i32 : i32, i32
  }
  func.func @transform_1(%arg0: i32) -> (i32, i32) {
    %c0_i32 = arith.constant 0 : i32
    %c0_i32_0 = arith.constant 0 : i32
    %c0_i32_1 = arith.constant 0 : i32
    return %c0_i32, %c0_i32_0 : i32, i32
  }
  func.func @transform_2(%arg0: i32) -> (i32, i32) {
    %c0_i32 = arith.constant 0 : i32
    %c0_i32_0 = arith.constant 0 : i32
    %c0_i32_1 = arith.constant 0 : i32
    return %c0_i32, %c0_i32_0 : i32, i32
  }
  func.func @transform_3(%arg0: i32) -> (i32, i32) {
    %c0_i32 = arith.constant 0 : i32
    %c0_i32_0 = arith.constant 0 : i32
    return %arg0, %c0_i32 : i32, i32
  }
}

</mosaic_0001>

<llo_original>
// kernel: categorical_forward_logits.1
$region0: #{categorical_forward_logits.1}
  #allocation0 [shape = 'u32[]', space=smem, size = 0x4, offset = 0x4, fixed_abs, tag = 'smem constant byte address 0x4 - core index']
  #allocation1 [shape = 'u32[144,128]{1,0:T(1,128)}', space=vmem, size = 0x12000, scoped, tag = 'internal scratch']
  %s0 = inlined_call_operand.hbm [shape: f32[8,32], index: 0, kind: input, shape index: {}]
  %s1 = inlined_call_operand.hbm [shape: bf16[32,128], index: 1, kind: input, shape index: {}]
  %s2 = inlined_call_operand.vmem [shape: f32[1,128], index: 2, kind: input, shape index: {}]
  %s3 = inlined_call_operand.hbm [shape: f32[8,128], index: 3, kind: output, shape index: {}]
  %s4 = sld [smem:[#allocation0]]
  $region30: #{categorical_forward_logits.1} parent=0
    _
  %s6 = ssub.s32 1, %s4
  %s7 = scalar_select 0, %s6, %s4
  $region1: #{categorical_forward_logits.1} parent=0
    #allocation2 [shape = 'u8[4096]{0}', space=vmem, size = 0x1000, scoped, tag = 'input window, operand 0, single buffered']
    #allocation3 [shape = 's32[1]{0}', space=sflag, size = 0x4, scoped, tag = 'scoped memory for categorical_forward_logits.1']
    #allocation4 [shape = 's32[1]{0}', space=sflag, size = 0x4, scoped, tag = 'scoped memory for categorical_forward_logits.1']
    #allocation5 [shape = 'u8[8192]{0}', space=vmem, size = 0x2000, scoped, tag = 'input window, operand 1, single buffered']
    #allocation6 [shape = 's32[1]{0}', space=sflag, size = 0x4, scoped, tag = 'scoped memory for categorical_forward_logits.1']
    #allocation7 [shape = 'u8[4096]{0}', space=vmem, size = 0x1000, scoped, tag = 'output window, operand 0, single buffered']
    %8 = vsyncpa [#allocation3], 0
    %9 = vsyncpa [#allocation6], 0
    %10 = vsyncpa [#allocation4], 0
    // Predicated region
    $region2: #{categorical_forward_logits.1} parent=1 // pred_check
      _
    $region3: #{categorical_forward_logits.1} parent=1 // pred_check_branch
      %12 = sbr.rel (0) target = $region5
    $region4: #{categorical_forward_logits.1} parent=1 // pred_region
      %s14 = ssub.s32 128, 128
      %15 = vsyncadd [#allocation3], %s14
      %s17 = sshll.u32 [#allocation2], 4
      %s18 = int_to_ptr.vmem [resolvable:$true] %s17
      %20 = dma.hbm_to_vmem [thread:$0]  %s0, 128, %s18, [#allocation3]
    $region5: #{categorical_forward_logits.1} parent=1 // pred_fallthru
      _
    // Predicated region
    $region6: #{categorical_forward_logits.1} parent=1 // pred_check
      _
    $region7: #{categorical_forward_logits.1} parent=1 // pred_check_branch
      %22 = sbr.rel (0) target = $region9
    $region8: #{categorical_forward_logits.1} parent=1 // pred_region
      %s24 = ssub.s32 256, 256
      %25 = vsyncadd [#allocation6], %s24
      %s26 = sshll.u32 [#allocation5], 4
      %s27 = int_to_ptr.vmem [resolvable:$true] %s26
      %32 = dma.hbm_to_vmem [thread:$0]  %s1, 256, %s27, [#allocation6], 64, 64, 4
    $region9: #{categorical_forward_logits.1} parent=1 // pred_fallthru
      _
    // Predicated region
    $region10: #{categorical_forward_logits.1} parent=1 // pred_check
      _
    $region11: #{categorical_forward_logits.1} parent=1 // pred_check_branch
      %34 = sbr.rel (0) target = $region13
    $region12: #{categorical_forward_logits.1} parent=1 // pred_region
      _
    $region13: #{categorical_forward_logits.1} parent=1 // pred_fallthru
      _
    // Predicated region
    $region14: #{categorical_forward_logits.1} parent=1 // pred_check
      _
    $region15: #{categorical_forward_logits.1} parent=1 // pred_check_branch
      %36 = sbr.rel (0) target = $region17
    $region16: #{categorical_forward_logits.1} parent=1 // pred_region
      %37 = dma.done [#allocation3], 128
    $region17: #{categorical_forward_logits.1} parent=1 // pred_fallthru
      _
    // Predicated region
    $region18: #{categorical_forward_logits.1} parent=1 // pred_check
      _
    $region19: #{categorical_forward_logits.1} parent=1 // pred_check_branch
      %39 = sbr.rel (0) target = $region21
    $region20: #{categorical_forward_logits.1} parent=1 // pred_region
      %40 = dma.done [#allocation6], 256
    $region21: #{categorical_forward_logits.1} parent=1 // pred_fallthru
      _
    %v42 = vld [vmem:[#allocation2] sm:$0xff]
    %v43 = vpack.c.bf16 %v42, %v42
    %v44 = vld [vmem:[#allocation5] sm:$0xf]
    %v45 = vld [vmem:[#allocation5 + $0x4] sm:$0xf]
    %v46 = vld [vmem:[#allocation5 + $0x8] sm:$0xf]
    %v47 = vld [vmem:[#allocation5 + $0xc] sm:$0xf]
    %v48 = vld [vmem:[%s2] sm:$0x1]
    %v50 = vlaneseq
    %v51 = vshrl.u32 %v50, 7
    %v52 = vsub.s32 0, %v51
    %v53 = vrot.slane %v48, %v52
    %v59 = vunpack.c.l.b16 %v44
    %v60 = vunpack.c.l.b16 %v45
    %v61 = vunpack.c.l.b16 %v46
    %v62 = vunpack.c.l.b16 %v47
    %v63 = vpack.c.b16 %v60, %v59
    %v64 = vpack.c.b16 %v62, %v61
    %vm67 = vcmask 261120
    %v69 = vsel %vm67, %v43, 0
    %71 = vmatprep.subr.bf16.mxu0 0
    %72 = vmatpush1.bf16.msra.mxu0 0
    %73 = vmatprep.subr.bf16.mxu0 0
    %74 = vmatpush1.bf16.msra.mxu0 0
    %75 = vmatprep.subr.bf16.mxu0 0
    %76 = vmatpush1.bf16.msra.mxu0 0
    %77 = vmatprep.subr.bf16.mxu0 0
    %78 = vmatpush1.bf16.msra.mxu0 0
    %79 = vmatprep.subr.bf16.mxu0 0
    %80 = vmatpush1.bf16.msra.mxu0 0
    %81 = vmatprep.subr.bf16.mxu0 0
    %82 = vmatpush1.bf16.msra.mxu0 0
    %83 = vmatprep.subr.bf16.mxu0 0
    %84 = vmatpush1.bf16.msra.mxu0 %v64
    %85 = vmatprep.subr.bf16.mxu0 0
    %86 = vmatpush1.bf16.msra.mxu0 %v63
    %87 = vmatprep.subr.bf16.mxu0 0
    %88 = vmatpush2.bf16.msra.mxu0 0
    %89 = vmatprep.subr.bf16.mxu0 0
    %90 = vmatpush2.bf16.msra.mxu0 0
    %91 = vmatprep.subr.bf16.mxu0 0
    %92 = vmatpush2.bf16.msra.mxu0 0
    %93 = vmatprep.subr.bf16.mxu0 0
    %94 = vmatpush2.bf16.msra.mxu0 0
    %95 = vmatprep.subr.bf16.mxu0 0
    %96 = vmatpush2.bf16.msra.mxu0 0
    %97 = vmatprep.subr.bf16.mxu0 0
    %98 = vmatpush2.bf16.msra.mxu0 0
    %99 = vmatprep.subr.bf16.mxu0 0
    %100 = vmatpush2.bf16.msra.mxu0 0
    %101 = vmatprep.subr.bf16.mxu0 0
    %102 = vmatpush2.bf16.msra.mxu0 0
    %103 = vmatprep.mubr.bf16.mxu0 0
    %104 = vmatmul.mubr.bf16.gmra.mxu0 %v69
    %v105 = vpop.f32.mrf.mxu0
    %v106 = vadd.f32 %v53, %v105
    %v107 = vpop.f32.mrf.mxu0
    %v108 = vpop.f32.mrf.mxu0
    %v109 = vpop.f32.mrf.mxu0
    %110 = vdwg.mxu0
    %111 = vmax.xlane.f32.xlu0 %v106
    %v112 = vpop.xlane.xlu0 %111
    %v113 = vsub.f32 %v106, %v112
    %v114 = vmul.f32 %v113, 1.442695
    %v115 = vpow.pop %v114
    %116 = vadd.xlane.f32.xlu0 %v115
    %v117 = vpop.xlane.xlu0 %116
    %v118 = vlog2.pop %v117
    %v119 = vmul.f32 %v118, 0.6931472
    %v120 = vadd.f32 %v112, %v119
    %v121 = vsub.f32 %v106, %v120
    %122 = vst [vmem:[#allocation7] sm:$0xff] %v121
    // Predicated region
    $region22: #{categorical_forward_logits.1} parent=1 // pred_check
      _
    $region23: #{categorical_forward_logits.1} parent=1 // pred_check_branch
      %124 = sbr.rel (0) target = $region25
    $region24: #{categorical_forward_logits.1} parent=1 // pred_region
      %s126 = ssub.s32 128, 128
      %127 = vsyncadd [#allocation4], %s126
      %s129 = sshll.u32 [#allocation7], 4
      %s130 = int_to_ptr.vmem [resolvable:$true] %s129
      %132 = dma.vmem_to_hbm [thread:$0]  %s130, 128, %s3, [#allocation4]
    $region25: #{categorical_forward_logits.1} parent=1 // pred_fallthru
      _
    // Predicated region
    $region26: #{categorical_forward_logits.1} parent=1 // pred_check
      _
    $region27: #{categorical_forward_logits.1} parent=1 // pred_check_branch
      %134 = sbr.rel (0) target = $region29
    $region28: #{categorical_forward_logits.1} parent=1 // pred_region
      %135 = dma.done [#allocation4], 128
    $region29: #{categorical_forward_logits.1} parent=1 // pred_fallthru
      _
    %136 = vsyncpa [#allocation3], 1
    %137 = vsyncpa [#allocation6], 1
    %138 = vsyncpa [#allocation4], 1

</llo_original>
